<compile_context>
chip_gen: v7x
topology: tpu7x:2x2x1
jax: 0.10.0
libtpu: 0.0.40
codegen_flags: <defaults>
</compile_context>

<pallas_src>
import jax
import jax.numpy as jnp
from jax.experimental import pallas as pl
from jax.experimental.pallas import tpu as pltpu


def _round_up(v, m):
    return (v + m - 1) // m * m


def _vmem_bytes(tm, n, cpad, stream_itemsize):
    """Tile-derived per-step VMEM footprint estimate (bytes)."""
    stream = 2 * 2 * tm * n * stream_itemsize                 # x + out tiles, double-buffered
    resident = 2 * (2 * n * cpad * 2 + (cpad + n) * 4)        # w1,w2 bf16 + b1,b2 f32 (x2 buffers)
    interm = tm * (n + cpad) * 4 + tm * (n + cpad) * 2        # h / p_d f32 + bf16 casts
    return stream + resident + interm


def _select_tiles(b, n, cpad, itemsize, block_batch=None):
    """Pick (tm, b_pad, grid) minimizing padded HBM traffic within a VMEM budget."""
    sublane = 16 if itemsize == 2 else 8
    if block_batch is None:
        # Target a ~4 MiB streamed x tile (roofline plateau), clamp to [256, 2048] rows.
        block_batch = (4 << 20) // max(1, n * itemsize)
        block_batch = max(256, min(2048, block_batch))
    block_batch = max(sublane, _round_up(block_batch, sublane))
    # Keep per-step VMEM under ~44 MiB so v7x's 64 MiB per-core VMEM is safe.
    while block_batch > sublane and _vmem_bytes(block_batch, n, cpad, itemsize) > (44 << 20):
        block_batch = max(sublane, _round_up(block_batch // 2, sublane))
    grid_n = -(-b // block_batch)
    # v7x megacore: make sure both TensorCores get a grid step when the batch
    # is large enough that the extra per-tile padding is negligible.
    if grid_n == 1 and b >= 4 * sublane:
        grid_n = 2
    tm = _round_up(-(-b // grid_n), sublane)
    return tm, grid_n * tm, grid_n


def _vdn_kernel(x_ref, w1_ref, b1_ref, w2_ref, b2_ref, out_ref):
    # x_ref:  (tm, N)    f32/bf16  current batch tile (streamed)
    # w1_ref: (N, Cpad)  bf16      a1 * fc_dnet Linear(N, cluster) weight (lane-padded)
    # b1_ref: (1, Cpad)  f32       bias_row @ W1 + b1  (affine pre-transform folded in)
    # w2_ref: (Cpad, N)  bf16      fc_dnet Linear(cluster, N) weight (sublane-padded)
    # b2_ref: (1, N)     f32
    x = x_ref[...]
    h = jnp.dot(x.astype(jnp.bfloat16), w1_ref[...],
                preferred_element_type=jnp.float32) + b1_ref[...]       # (tm, Cpad)
    logits = jnp.dot(h.astype(jnp.bfloat16), w2_ref[...],
                     preferred_element_type=jnp.float32) + b2_ref[...]  # (tm, N)
    p_d = jax.nn.sigmoid(logits)                                        # exp rides the EUP slot
    # TODO(synk): F.dropout(x, 0.6*p_d+0.2, training=True) with a *tensor* p is
    # stochastic / non-standard torch; eval mode (training=False) is the identity
    # implemented here.
    out_ref[...] = (p_d * x.astype(jnp.float32)).astype(out_ref.dtype)


def vdn_forward(x, w, params, w_grad=None, *, block_batch=None):
    """Pallas VDN forward (eval mode).

    x: (B, N) float32 or bfloat16 (bf16 halves streamed HBM bytes; output
    dtype matches x).  w, w_grad: (num_classes, N).
    """
    b, n = x.shape
    cluster = params["w1"].shape[1]
    cpad = _round_up(cluster, 128)                 # lane-dense hidden dim
    itemsize = jnp.dtype(x.dtype).itemsize

    # ---- hoisted conv_w / conv_g row bias, folded into the first Linear -------
    bias = params["a2"] * (params["cw"] @ w + params["cb_w"])           # (1, N)
    if w_grad is not None:
        bias = bias + params["a3"] * (params["cg"] @ w_grad + params["cb_g"])
    bias = bias.reshape(1, n).astype(jnp.float32)

    w1 = params["w1"].astype(jnp.float32)                               # (N, cluster)
    b1 = params["b1"].reshape(1, cluster).astype(jnp.float32)
    w1_fused = params["a1"] * w1                                        # x @ (a1*W1)
    b1_fused = bias @ w1 + b1                                           # (1, cluster), f32

    pad_c = cpad - cluster
    w1_p = jnp.pad(w1_fused.astype(jnp.bfloat16), ((0, 0), (0, pad_c)))
    b1_p = jnp.pad(b1_fused, ((0, 0), (0, pad_c)))
    w2_p = jnp.pad(params["w2"].astype(jnp.bfloat16), ((0, pad_c), (0, 0)))
    b2 = params["b2"].reshape(1, n).astype(jnp.float32)

    # ---- padding-minimal, VMEM-bounded batch tiling ----------------------------
    tm, b_pad, grid_n = _select_tiles(b, n, cpad, itemsize, block_batch)
    x_in = jnp.pad(x, ((0, b_pad - b), (0, 0))) if b_pad != b else x

    need = _vmem_bytes(tm, n, cpad, itemsize)
    vmem_limit = min(96 << 20, max(32 << 20, int(1.5 * need) + (2 << 20)))

    cost = pl.CostEstimate(
        flops=4 * b_pad * n * cpad,                      # two matmuls
        transcendentals=b_pad * n,                       # sigmoid
        bytes_accessed=(2 * b_pad * n * itemsize         # x in + out
                        + 2 * n * cpad * 2               # w1, w2 (bf16)
                        + (cpad + 2 * n) * 4))           # b1, b2

    out = pl.pallas_call(
        _vdn_kernel,
        out_shape=jax.ShapeDtypeStruct((b_pad, n), x.dtype),
        grid_spec=pltpu.PrefetchScalarGridSpec(
            num_scalar_prefetch=0,
            grid=(grid_n,),
            in_specs=[
                pl.BlockSpec((tm, n), lambda i: (i, 0)),     # x tile (streamed)
                pl.BlockSpec((n, cpad), lambda i: (0, 0)),   # a1*W1 (resident)
                pl.BlockSpec((1, cpad), lambda i: (0, 0)),   # fused b1 (resident)
                pl.BlockSpec((cpad, n), lambda i: (0, 0)),   # W2 (resident)
                pl.BlockSpec((1, n), lambda i: (0, 0)),      # b2 (resident)
            ],
            out_specs=pl.BlockSpec((tm, n), lambda i: (i, 0)),
        ),
        compiler_params=pltpu.CompilerParams(
            dimension_semantics=("parallel",),
            vmem_limit_bytes=vmem_limit),
        cost_estimate=cost,
    )(x_in, w1_p, b1_p, w2_p, b2)

    return out[:b] if b_pad != b else out


def vdn_reference(x, w, params, w_grad=None):
    """Pure-JAX (f32) reference of the PyTorch forward (eval mode)."""
    weight = (params["cw"] @ w).reshape(1, -1) + params["cb_w"]
    f_d = params["a1"] * x + params["a2"] * weight
    if w_grad is not None:
        wderi = (params["cg"] @ w_grad).reshape(1, -1) + params["cb_g"]
        f_d = f_d + params["a3"] * wderi
    h = f_d @ params["w1"] + params["b1"]
    p_d = jax.nn.sigmoid(h @ params["w2"] + params["b2"])
    return p_d * x


def make_params(key, in_planes, num_classes):
    cluster = in_planes // 16
    ks = jax.random.split(key, 6)
    scale = 0.05
    return {
        "a1": jnp.float32(1.0),
        "a2": jnp.float32(1.0),
        "a3": jnp.float32(1.0),
        # conv_w / conv_g: Conv2d(num_classes, 1, 1) -> weight (1, C), scalar bias
        "cw": scale * jax.random.normal(ks[0], (1, num_classes), jnp.float32),
        "cb_w": jnp.float32(0.01),
        "cg": scale * jax.random.normal(ks[1], (1, num_classes), jnp.float32),
        "cb_g": jnp.float32(-0.02),
        # fc_dnet: Linear(N, cluster), Linear(cluster, N)  (stored as (in, out))
        "w1": scale * jax.random.normal(ks[2], (in_planes, cluster), jnp.float32),
        "b1": scale * jax.random.normal(ks[3], (1, cluster), jnp.float32),
        "w2": scale * jax.random.normal(ks[4], (cluster, in_planes), jnp.float32),
        "b2": scale * jax.random.normal(ks[5], (1, in_planes), jnp.float32),
    }


if __name__ == "__main__":
    B, N, C = 4, 256, 8          # batch, in_planes, num_classes
    key = jax.random.PRNGKey(0)
    kx, kw, kg, kp = jax.random.split(key, 4)

    x = jax.random.normal(kx, (B, N), jnp.float32)
    w = jax.random.normal(kw, (C, N), jnp.float32)
    w_grad = jax.random.normal(kg, (C, N), jnp.float32)
    params = make_params(kp, N, C)

    # path 1: w_grad is None (f32 streaming)
    out0 = jax.block_until_ready(vdn_forward(x, w, params))
    ref0 = vdn_reference(x, w, params)
    assert out0.shape == ref0.shape and out0.dtype == ref0.dtype
    assert jnp.allclose(out0, ref0, atol=3e-2, rtol=3e-2), "mismatch (no w_grad)"

    # path 2: with w_grad (f32 streaming)
    out1 = jax.block_until_ready(vdn_forward(x, w, params, w_grad=w_grad))
    ref1 = vdn_reference(x, w, params, w_grad=w_grad)
    assert jnp.allclose(out1, ref1, atol=3e-2, rtol=3e-2), "mismatch (with w_grad)"

    # path 3: bf16 streaming path (halves streamed HBM bytes; f32 accumulate inside)
    out2 = jax.block_until_ready(
        vdn_forward(x.astype(jnp.bfloat16), w, params, w_grad=w_grad))
    assert out2.dtype == jnp.bfloat16
    assert jnp.allclose(out2.astype(jnp.float32), ref1, atol=6e-2, rtol=6e-2), \
        "mismatch (bf16 streaming)"

    print("KERNEL_OK")
</pallas_src>

<mosaic_0001>
module attributes {stable_mosaic.version = 11 : i64} {
  func.func @_vdn_kernel(%arg0: i32, %arg1: memref<8x256xf32, #tpu.memory_space<vmem>>, %arg2: memref<256x128xbf16, #tpu.memory_space<vmem>>, %arg3: memref<1x128xf32, #tpu.memory_space<vmem>>, %arg4: memref<128x256xbf16, #tpu.memory_space<vmem>>, %arg5: memref<1x256xf32, #tpu.memory_space<vmem>>, %arg6: memref<8x256xf32, #tpu.memory_space<vmem>>) attributes {dimension_semantics = [#tpu.dimension_semantics<parallel>], iteration_bounds = array<i64: 1>, scalar_prefetch = 0 : i64, scratch_operands = 0 : i64, tpu.core_type = #tpu.core_type<tc>, window_params = [{transform_indices = @transform_0, window_bounds = array<i64: 8, 256>}, {pipeline_mode = #tpu.pipeline_mode<synchronous>, transform_indices = @transform_1, window_bounds = array<i64: 256, 128>}, {pipeline_mode = #tpu.pipeline_mode<synchronous>, transform_indices = @transform_2, window_bounds = array<i64: 1, 128>}, {pipeline_mode = #tpu.pipeline_mode<synchronous>, transform_indices = @transform_3, window_bounds = array<i64: 128, 256>}, {pipeline_mode = #tpu.pipeline_mode<synchronous>, transform_indices = @transform_4, window_bounds = array<i64: 1, 256>}, {transform_indices = @transform_5, window_bounds = array<i64: 8, 256>}]} {
    %c0 = arith.constant 0 : index
    %c0_0 = arith.constant 0 : index
    %0 = vector.load %arg1[%c0, %c0_0] : memref<8x256xf32, #tpu.memory_space<vmem>>, vector<8x256xf32>
    %1 = arith.truncf %0 : vector<8x256xf32> to vector<8x256xbf16>
    %c0_1 = arith.constant 0 : index
    %c0_2 = arith.constant 0 : index
    %2 = vector.load %arg2[%c0_1, %c0_2] : memref<256x128xbf16, #tpu.memory_space<vmem>>, vector<256x128xbf16>
    %cst = arith.constant dense<0.000000e+00> : vector<8x128xf32>
    %3 = tpu.matmul %1, %2, %cst {dimension_numbers = #tpu.dot_dimension_numbers<[1], [0], [0], [1], [0, 0, 1, 1], [], []>} : vector<8x256xbf16>, vector<256x128xbf16>, vector<8x128xf32> -> vector<8x128xf32>
    %c0_3 = arith.constant 0 : index
    %c0_4 = arith.constant 0 : index
    %4 = vector.load %arg3[%c0_3, %c0_4] : memref<1x128xf32, #tpu.memory_space<vmem>>, vector<1x128xf32>
    %5 = vector.broadcast %4 : vector<1x128xf32> to vector<8x128xf32>
    %6 = arith.addf %3, %5 : vector<8x128xf32>
    %7 = arith.truncf %6 : vector<8x128xf32> to vector<8x128xbf16>
    %c0_5 = arith.constant 0 : index
    %c0_6 = arith.constant 0 : index
    %8 = vector.load %arg4[%c0_5, %c0_6] : memref<128x256xbf16, #tpu.memory_space<vmem>>, vector<128x256xbf16>
    %cst_7 = arith.constant dense<0.000000e+00> : vector<8x256xf32>
    %9 = tpu.matmul %7, %8, %cst_7 {dimension_numbers = #tpu.dot_dimension_numbers<[1], [0], [0], [1], [0, 0, 1, 1], [], []>} : vector<8x128xbf16>, vector<128x256xbf16>, vector<8x256xf32> -> vector<8x256xf32>
    %c0_8 = arith.constant 0 : index
    %c0_9 = arith.constant 0 : index
    %10 = vector.load %arg5[%c0_8, %c0_9] : memref<1x256xf32, #tpu.memory_space<vmem>>, vector<1x256xf32>
    %11 = vector.broadcast %10 : vector<1x256xf32> to vector<8x256xf32>
    %12 = arith.addf %9, %11 : vector<8x256xf32>
    %13 = arith.negf %12 : vector<8x256xf32>
    %14 = math.exp %13 : vector<8x256xf32>
    %cst_10 = arith.constant 1.000000e+00 : f32
    %15 = vector.broadcast %cst_10 : f32 to vector<8x256xf32>
    %16 = arith.addf %15, %14 : vector<8x256xf32>
    %17 = arith.divf %15, %16 : vector<8x256xf32>
    %18 = arith.mulf %17, %0 : vector<8x256xf32>
    %c0_11 = arith.constant 0 : index
    %c0_12 = arith.constant 0 : index
    %19 = vector.load %arg6[%c0_11, %c0_12] : memref<8x256xf32, #tpu.memory_space<vmem>>, vector<8x256xf32>
    tpu.vector_store %arg6[%c0_11, %c0_12], %18 {strides = array<i32>} : memref<8x256xf32, #tpu.memory_space<vmem>>, vector<8x256xf32>,
    return
  }
  func.func @transform_0(%arg0: i32) -> (i32, i32) {
    %c0_i32 = arith.constant 0 : i32
    %c0_i32_0 = arith.constant 0 : i32
    return %arg0, %c0_i32 : i32, i32
  }
  func.func @transform_1(%arg0: i32) -> (i32, i32) {
    %c0_i32 = arith.constant 0 : i32
    %c0_i32_0 = arith.constant 0 : i32
    %c0_i32_1 = arith.constant 0 : i32
    return %c0_i32, %c0_i32_0 : i32, i32
  }
  func.func @transform_2(%arg0: i32) -> (i32, i32) {
    %c0_i32 = arith.constant 0 : i32
    %c0_i32_0 = arith.constant 0 : i32
    %c0_i32_1 = arith.constant 0 : i32
    return %c0_i32, %c0_i32_0 : i32, i32
  }
  func.func @transform_3(%arg0: i32) -> (i32, i32) {
    %c0_i32 = arith.constant 0 : i32
    %c0_i32_0 = arith.constant 0 : i32
    %c0_i32_1 = arith.constant 0 : i32
    return %c0_i32, %c0_i32_0 : i32, i32
  }
  func.func @transform_4(%arg0: i32) -> (i32, i32) {
    %c0_i32 = arith.constant 0 : i32
    %c0_i32_0 = arith.constant 0 : i32
    %c0_i32_1 = arith.constant 0 : i32
    return %c0_i32, %c0_i32_0 : i32, i32
  }
  func.func @transform_5(%arg0: i32) -> (i32, i32) {
    %c0_i32 = arith.constant 0 : i32
    %c0_i32_0 = arith.constant 0 : i32
    return %arg0, %c0_i32 : i32, i32
  }
}

</mosaic_0001>

<llo_original>
// kernel: tpu_custom_call.1
$region0: #{tpu_custom_call.1}
  #allocation0 [shape = 'u32[]', space=smem, size = 0x4, offset = 0x4, fixed_abs, tag = 'smem constant byte address 0x4 - core index']
  #allocation1 [shape = 'u32[144,128]{1,0:T(1,128)}', space=vmem, size = 0x12000, scoped, tag = 'internal scratch']
  %s0 = inlined_call_operand.hbm [shape: f32[8,256], index: 0, kind: input, shape index: {}]
  %s1 = inlined_call_operand.hbm [shape: bf16[256,128], index: 1, kind: input, shape index: {}]
  %s2 = inlined_call_operand.vmem [shape: f32[1,128], index: 2, kind: input, shape index: {}]
  %s3 = inlined_call_operand.hbm [shape: bf16[128,256], index: 3, kind: input, shape index: {}]
  %s4 = inlined_call_operand.vmem [shape: f32[1,256], index: 4, kind: input, shape index: {}]
  %s5 = inlined_call_operand.hbm [shape: f32[8,256], index: 5, kind: output, shape index: {}]
  %s6 = sld [smem:[#allocation0]]
  $region42: #{tpu_custom_call.1} parent=0
    _
  %s8 = ssub.s32 1, %s6
  %s9 = scalar_select 0, %s8, %s6
  $region1: #{tpu_custom_call.1} parent=0
    #allocation2 [shape = 'u8[8192]{0}', space=vmem, size = 0x2000, scoped, tag = 'input window, operand 0, single buffered']
    #allocation3 [shape = 's32[1]{0}', space=sflag, size = 0x4, scoped, tag = 'scoped memory for tpu_custom_call.1']
    #allocation4 [shape = 's32[1]{0}', space=sflag, size = 0x4, scoped, tag = 'scoped memory for tpu_custom_call.1']
    #allocation5 [shape = 'u8[65536]{0}', space=vmem, size = 0x10000, scoped, tag = 'input window, operand 1, single buffered']
    #allocation6 [shape = 's32[1]{0}', space=sflag, size = 0x4, scoped, tag = 'scoped memory for tpu_custom_call.1']
    #allocation7 [shape = 'u8[65536]{0}', space=vmem, size = 0x10000, scoped, tag = 'input window, operand 3, single buffered']
    #allocation8 [shape = 'u8[8192]{0}', space=vmem, size = 0x2000, scoped, tag = 'output window, operand 0, single buffered']
    %10 = vsyncpa [#allocation3], 0
    %11 = vsyncpa [#allocation6], 0
    %12 = vsyncpa [#allocation4], 0
    // Predicated region
    $region2: #{tpu_custom_call.1} parent=1 // pred_check
      _
    $region3: #{tpu_custom_call.1} parent=1 // pred_check_branch
      %14 = sbr.rel (0) target = $region5
    $region4: #{tpu_custom_call.1} parent=1 // pred_region
      %s16 = ssub.s32 256, 256
      %17 = vsyncadd [#allocation3], %s16
      %s19 = sshll.u32 [#allocation2], 4
      %s20 = int_to_ptr.vmem [resolvable:$true] %s19
      %22 = dma.hbm_to_vmem [thread:$0]  %s0, 256, %s20, [#allocation3]
    $region5: #{tpu_custom_call.1} parent=1 // pred_fallthru
      _
    // Predicated region
    $region6: #{tpu_custom_call.1} parent=1 // pred_check
      _
    $region7: #{tpu_custom_call.1} parent=1 // pred_check_branch
      %24 = sbr.rel (0) target = $region9
    $region8: #{tpu_custom_call.1} parent=1 // pred_region
      %s26 = ssub.s32 2048, 2048
      %27 = vsyncadd [#allocation6], %s26
      %s28 = sshll.u32 [#allocation5], 4
      %s29 = int_to_ptr.vmem [resolvable:$true] %s28
      %34 = dma.hbm_to_vmem [thread:$0]  %s1, 2048, %s29, [#allocation6], 64, 64, 4
    $region9: #{tpu_custom_call.1} parent=1 // pred_fallthru
      _
    // Predicated region
    $region10: #{tpu_custom_call.1} parent=1 // pred_check
      _
    $region11: #{tpu_custom_call.1} parent=1 // pred_check_branch
      %36 = sbr.rel (0) target = $region13
    $region12: #{tpu_custom_call.1} parent=1 // pred_region
      _
    $region13: #{tpu_custom_call.1} parent=1 // pred_fallthru
      _
    // Predicated region
    $region14: #{tpu_custom_call.1} parent=1 // pred_check
      _
    $region15: #{tpu_custom_call.1} parent=1 // pred_check_branch
      %38 = sbr.rel (0) target = $region17
    $region16: #{tpu_custom_call.1} parent=1 // pred_region
      %s40 = ssub.s32 2048, 2048
      %41 = vsyncadd [#allocation6], %s40
      %s42 = sshll.u32 [#allocation7], 4
      %s43 = int_to_ptr.vmem [resolvable:$true] %s42
      %48 = dma.hbm_to_vmem [thread:$0]  %s3, 2048, %s43, [#allocation6], 128, 128, 8
    $region17: #{tpu_custom_call.1} parent=1 // pred_fallthru
      _
    // Predicated region
    $region18: #{tpu_custom_call.1} parent=1 // pred_check
      _
    $region19: #{tpu_custom_call.1} parent=1 // pred_check_branch
      %50 = sbr.rel (0) target = $region21
    $region20: #{tpu_custom_call.1} parent=1 // pred_region
      _
    $region21: #{tpu_custom_call.1} parent=1 // pred_fallthru
      _
    // Predicated region
    $region22: #{tpu_custom_call.1} parent=1 // pred_check
      _
    $region23: #{tpu_custom_call.1} parent=1 // pred_check_branch
      %52 = sbr.rel (0) target = $region25
    $region24: #{tpu_custom_call.1} parent=1 // pred_region
      %53 = dma.done [#allocation3], 256
    $region25: #{tpu_custom_call.1} parent=1 // pred_fallthru
      _
    // Predicated region
    $region26: #{tpu_custom_call.1} parent=1 // pred_check
      _
    $region27: #{tpu_custom_call.1} parent=1 // pred_check_branch
      %55 = sbr.rel (0) target = $region29
    $region28: #{tpu_custom_call.1} parent=1 // pred_region
      %56 = dma.done [#allocation6], 2048
    $region29: #{tpu_custom_call.1} parent=1 // pred_fallthru
      _
    // Predicated region
    $region30: #{tpu_custom_call.1} parent=1 // pred_check
      _
    $region31: #{tpu_custom_call.1} parent=1 // pred_check_branch
      %58 = sbr.rel (0) target = $region33
    $region32: #{tpu_custom_call.1} parent=1 // pred_region
      %59 = dma.done [#allocation6], 2048
    $region33: #{tpu_custom_call.1} parent=1 // pred_fallthru
      _
    %v61 = vld [vmem:[#allocation2] sm:$0xff]
    %v62 = vld [vmem:[#allocation2 + $0x8] sm:$0xff]
    %v63 = vpack.c.bf16 %v61, %v61
    %v64 = vpack.c.bf16 %v62, %v62
    %v65 = vld [vmem:[#allocation5] sm:$0xf]
    %v66 = vld [vmem:[#allocation5 + $0x4] sm:$0xf]
    %v67 = vld [vmem:[#allocation5 + $0x8] sm:$0xf]
    %v68 = vld [vmem:[#allocation5 + $0xc] sm:$0xf]
    %v69 = vld [vmem:[#allocation5 + $0x10] sm:$0xf]
    %v70 = vld [vmem:[#allocation5 + $0x14] sm:$0xf]
    %v71 = vld [vmem:[#allocation5 + $0x18] sm:$0xf]
    %v72 = vld [vmem:[#allocation5 + $0x1c] sm:$0xf]
    %v73 = vld [vmem:[#allocation5 + $0x20] sm:$0xf]
    %v74 = vld [vmem:[#allocation5 + $0x24] sm:$0xf]
    %v75 = vld [vmem:[#allocation5 + $0x28] sm:$0xf]
    %v76 = vld [vmem:[#allocation5 + $0x2c] sm:$0xf]
    %v77 = vld [vmem:[#allocation5 + $0x30] sm:$0xf]
    %v78 = vld [vmem:[#allocation5 + $0x34] sm:$0xf]
    %v79 = vld [vmem:[#allocation5 + $0x38] sm:$0xf]
    %v80 = vld [vmem:[#allocation5 + $0x3c] sm:$0xf]
    %v81 = vld [vmem:[#allocation5 + $0x40] sm:$0xf]
    %v82 = vld [vmem:[#allocation5 + $0x44] sm:$0xf]
    %v83 = vld [vmem:[#allocation5 + $0x48] sm:$0xf]
    %v84 = vld [vmem:[#allocation5 + $0x4c] sm:$0xf]
    %v85 = vld [vmem:[#allocation5 + $0x50] sm:$0xf]
    %v86 = vld [vmem:[#allocation5 + $0x54] sm:$0xf]
    %v87 = vld [vmem:[#allocation5 + $0x58] sm:$0xf]
    %v88 = vld [vmem:[#allocation5 + $0x5c] sm:$0xf]
    %v89 = vld [vmem:[#allocation5 + $0x60] sm:$0xf]
    %v90 = vld [vmem:[#allocation5 + $0x64] sm:$0xf]
    %v91 = vld [vmem:[#allocation5 + $0x68] sm:$0xf]
    %v92 = vld [vmem:[#allocation5 + $0x6c] sm:$0xf]
    %v93 = vld [vmem:[#allocation5 + $0x70] sm:$0xf]
    %v94 = vld [vmem:[#allocation5 + $0x74] sm:$0xf]
    %v95 = vld [vmem:[#allocation5 + $0x78] sm:$0xf]
    %v96 = vld [vmem:[#allocation5 + $0x7c] sm:$0xf]
    %v97 = vld [vmem:[%s2] sm:$0x1]
    %v99 = vlaneseq
    %v100 = vshrl.u32 %v99, 7
    %v101 = vsub.s32 0, %v100
    %v102 = vrot.slane %v97, %v101
    %v136 = vunpack.c.l.b16 %v65
    %v137 = vunpack.c.l.b16 %v66
    %v138 = vunpack.c.l.b16 %v67
    %v139 = vunpack.c.l.b16 %v68
    %v140 = vunpack.c.l.b16 %v69
    %v141 = vunpack.c.l.b16 %v70
    %v142 = vunpack.c.l.b16 %v71
    %v143 = vunpack.c.l.b16 %v72
    %v144 = vunpack.c.l.b16 %v73
    %v145 = vunpack.c.l.b16 %v74
    %v146 = vunpack.c.l.b16 %v75
    %v147 = vunpack.c.l.b16 %v76
    %v148 = vunpack.c.l.b16 %v77
    %v149 = vunpack.c.l.b16 %v78
    %v150 = vunpack.c.l.b16 %v79
    %v151 = vunpack.c.l.b16 %v80
    %v152 = vunpack.c.l.b16 %v81
    %v153 = vunpack.c.l.b16 %v82
    %v154 = vunpack.c.l.b16 %v83
    %v155 = vunpack.c.l.b16 %v84
    %v156 = vunpack.c.l.b16 %v85
    %v157 = vunpack.c.l.b16 %v86
    %v158 = vunpack.c.l.b16 %v87
    %v159 = vunpack.c.l.b16 %v88
    %v160 = vunpack.c.l.b16 %v89
    %v161 = vunpack.c.l.b16 %v90
    %v162 = vunpack.c.l.b16 %v91
    %v163 = vunpack.c.l.b16 %v92
    %v164 = vunpack.c.l.b16 %v93
    %v165 = vunpack.c.l.b16 %v94
    %v166 = vunpack.c.l.b16 %v95
    %v167 = vunpack.c.l.b16 %v96
    %v168 = vpack.c.b16 %v137, %v136
    %v169 = vpack.c.b16 %v139, %v138
    %v170 = vpack.c.b16 %v141, %v140
    %v171 = vpack.c.b16 %v143, %v142
    %v172 = vpack.c.b16 %v145, %v144
    %v173 = vpack.c.b16 %v147, %v146
    %v174 = vpack.c.b16 %v149, %v148
    %v175 = vpack.c.b16 %v151, %v150
    %v176 = vpack.c.b16 %v153, %v152
    %v177 = vpack.c.b16 %v155, %v154
    %v178 = vpack.c.b16 %v157, %v156
    %v179 = vpack.c.b16 %v159, %v158
    %v180 = vpack.c.b16 %v161, %v160
    %v181 = vpack.c.b16 %v163, %v162
    %v182 = vpack.c.b16 %v165, %v164
    %v183 = vpack.c.b16 %v167, %v166
    %200 = vmatprep.subr.bf16.mxu0 0
    %201 = vmatpush1.bf16.msra.mxu0 %v168
    %202 = vmatprep.subr.bf16.mxu0 0
    %203 = vmatpush1.bf16.msra.mxu0 %v169
    %204 = vmatprep.subr.bf16.mxu0 0
    %205 = vmatpush1.bf16.msra.mxu0 %v170
    %206 = vmatprep.subr.bf16.mxu0 0
    %207 = vmatpush1.bf16.msra.mxu0 %v171
    %208 = vmatprep.subr.bf16.mxu0 0
    %209 = vmatpush1.bf16.msra.mxu0 %v172
    %210 = vmatprep.subr.bf16.mxu0 0
    %211 = vmatpush1.bf16.msra.mxu0 %v173
    %212 = vmatprep.subr.bf16.mxu0 0
    %213 = vmatpush1.bf16.msra.mxu0 %v174
    %214 = vmatprep.subr.bf16.mxu0 0
    %215 = vmatpush1.bf16.msra.mxu0 %v175
    %216 = vmatprep.subr.bf16.mxu0 0
    %217 = vmatpush1.bf16.msra.mxu0 %v176
    %218 = vmatprep.subr.bf16.mxu0 0
    %219 = vmatpush1.bf16.msra.mxu0 %v177
    %220 = vmatprep.subr.bf16.mxu0 0
    %221 = vmatpush1.bf16.msra.mxu0 %v178
    %222 = vmatprep.subr.bf16.mxu0 0
    %223 = vmatpush1.bf16.msra.mxu0 %v179
    %224 = vmatprep.subr.bf16.mxu0 0
    %225 = vmatpush1.bf16.msra.mxu0 %v180
    %226 = vmatprep.subr.bf16.mxu0 0
    %227 = vmatpush1.bf16.msra.mxu0 %v181
    %228 = vmatprep.subr.bf16.mxu0 0
    %229 = vmatpush1.bf16.msra.mxu0 %v182
    %230 = vmatprep.subr.bf16.mxu0 0
    %231 = vmatpush1.bf16.msra.mxu0 %v183
    %232 = vmatprep.mubr.bf16.mxu0 %v64
    %233 = vmatmul.mubr.bf16.gmra.mrb[0].mxu0 %v63
    %v234 = vpop.f32.mrb[0].mxu0
    %v235 = vadd.f32 %v102, %v234
    %v236 = vpop.f32.mrb[0].mxu0
    %v237 = vpop.f32.mrb[0].mxu0
    %v238 = vpop.f32.mrb[0].mxu0
    %239 = vdwg.mxu0
    %v240 = vpack.c.bf16 %v235, %v235
    %v241 = vld [vmem:[#allocation7] sm:$0xff]
    %v242 = vld [vmem:[#allocation7 + $0x8] sm:$0xff]
    %v243 = vld [vmem:[#allocation7 + $0x10] sm:$0xff]
    %v244 = vld [vmem:[#allocation7 + $0x18] sm:$0xff]
    %v245 = vld [vmem:[#allocation7 + $0x20] sm:$0xff]
    %v246 = vld [vmem:[#allocation7 + $0x28] sm:$0xff]
    %v247 = vld [vmem:[#allocation7 + $0x30] sm:$0xff]
    %v248 = vld [vmem:[#allocation7 + $0x38] sm:$0xff]
    %v249 = vld [vmem:[#allocation7 + $0x40] sm:$0xff]
    %v250 = vld [vmem:[#allocation7 + $0x48] sm:$0xff]
    %v251 = vld [vmem:[#allocation7 + $0x50] sm:$0xff]
    %v252 = vld [vmem:[#allocation7 + $0x58] sm:$0xff]
    %v253 = vld [vmem:[#allocation7 + $0x60] sm:$0xff]
    %v254 = vld [vmem:[#allocation7 + $0x68] sm:$0xff]
    %v255 = vld [vmem:[#allocation7 + $0x70] sm:$0xff]
    %v256 = vld [vmem:[#allocation7 + $0x78] sm:$0xff]
    %v257 = vld [vmem:[%s4] sm:$0x3]
    %v259 = vlaneseq
    %v260 = vshrl.u32 %v259, 7
    %v261 = vsub.s32 0, %v260
    %v262 = vrot.slane %v257, %v261
    %v263 = vlaneseq
    %v264 = vshrl.u32 %v263, 7
    %v265 = vsub.s32 1, %v264
    %v266 = vrot.slane %v257, %v265
    %v285 = vunpack.c.l.b16 %v241
    %v286 = vunpack.c.h.b16 %v241
    %v287 = vunpack.c.l.b16 %v242
    %v288 = vunpack.c.h.b16 %v242
    %v289 = vunpack.c.l.b16 %v243
    %v290 = vunpack.c.h.b16 %v243
    %v291 = vunpack.c.l.b16 %v244
    %v292 = vunpack.c.h.b16 %v244
    %v293 = vunpack.c.l.b16 %v245
    %v294 = vunpack.c.h.b16 %v245
    %v295 = vunpack.c.l.b16 %v246
    %v296 = vunpack.c.h.b16 %v246
    %v297 = vunpack.c.l.b16 %v247
    %v298 = vunpack.c.h.b16 %v247
    %v299 = vunpack.c.l.b16 %v248
    %v300 = vunpack.c.h.b16 %v248
    %v301 = vunpack.c.l.b16 %v249
    %v302 = vunpack.c.h.b16 %v249
    %v303 = vunpack.c.l.b16 %v250
    %v304 = vunpack.c.h.b16 %v250
    %v305 = vunpack.c.l.b16 %v251
    %v306 = vunpack.c.h.b16 %v251
    %v307 = vunpack.c.l.b16 %v252
    %v308 = vunpack.c.h.b16 %v252
    %v309 = vunpack.c.l.b16 %v253
    %v310 = vunpack.c.h.b16 %v253
    %v311 = vunpack.c.l.b16 %v254
    %v312 = vunpack.c.h.b16 %v254
    %v313 = vunpack.c.l.b16 %v255
    %v314 = vunpack.c.h.b16 %v255
    %v315 = vunpack.c.l.b16 %v256
    %v316 = vunpack.c.h.b16 %v256
    %v317 = vpack.c.b16 %v287, %v285
    %v318 = vpack.c.b16 %v288, %v286
    %v319 = vpack.c.b16 %v291, %v289
    %v320 = vpack.c.b16 %v292, %v290
    %v321 = vpack.c.b16 %v295, %v293
    %v322 = vpack.c.b16 %v296, %v294
    %v323 = vpack.c.b16 %v299, %v297
    %v324 = vpack.c.b16 %v300, %v298
    %v325 = vpack.c.b16 %v303, %v301
    %v326 = vpack.c.b16 %v304, %v302
    %v327 = vpack.c.b16 %v307, %v305
    %v328 = vpack.c.b16 %v308, %v306
    %v329 = vpack.c.b16 %v311, %v309
    %v330 = vpack.c.b16 %v312, %v310
    %v331 = vpack.c.b16 %v315, %v313
    %v332 = vpack.c.b16 %v316, %v314
    %349 = vmatprep.subr.bf16.mxu0 %v318
    %350 = vmatpush1.bf16.msra.mxu0 %v317
    %351 = vmatprep.subr.bf16.mxu0 %v320
    %352 = vmatpush1.bf16.msra.mxu0 %v319
    %353 = vmatprep.subr.bf16.mxu0 %v322
    %354 = vmatpush1.bf16.msra.mxu0 %v321
    %355 = vmatprep.subr.bf16.mxu0 %v324
    %356 = vmatpush1.bf16.msra.mxu0 %v323
    %357 = vmatprep.subr.bf16.mxu0 %v326
    %358 = vmatpush1.bf16.msra.mxu0 %v325
    %359 = vmatprep.subr.bf16.mxu0 %v328
    %360 = vmatpush1.bf16.msra.mxu0 %v327
    %361 = vmatprep.subr.bf16.mxu0 %v330
    %362 = vmatpush1.bf16.msra.mxu0 %v329
    %363 = vmatprep.subr.bf16.mxu0 %v332
    %364 = vmatpush1.bf16.msra.mxu0 %v331
    %365 = vmatprep.subr.bf16.mxu0 0
    %366 = vmatpush1.bf16.msra.mxu0 0
    %367 = vmatprep.subr.bf16.mxu0 0
    %368 = vmatpush1.bf16.msra.mxu0 0
    %369 = vmatprep.subr.bf16.mxu0 0
    %370 = vmatpush1.bf16.msra.mxu0 0
    %371 = vmatprep.subr.bf16.mxu0 0
    %372 = vmatpush1.bf16.msra.mxu0 0
    %373 = vmatprep.subr.bf16.mxu0 0
    %374 = vmatpush1.bf16.msra.mxu0 0
    %375 = vmatprep.subr.bf16.mxu0 0
    %376 = vmatpush1.bf16.msra.mxu0 0
    %377 = vmatprep.subr.bf16.mxu0 0
    %378 = vmatpush1.bf16.msra.mxu0 0
    %379 = vmatprep.subr.bf16.mxu0 0
    %380 = vmatpush1.bf16.msra.mxu0 0
    %381 = vmatprep.mubr.bf16.mxu0 0
    %382 = vmatmul.mubr.bf16.gmra.mrb[0].mxu0 %v240
    %v383 = vpop.f32.mrb[0].mxu0
    %v384 = vadd.f32 %v262, %v383
    %v385 = vpop.f32.mrb[0].mxu0
    %v386 = vadd.f32 %v266, %v385
    %v387 = vpop.f32.mrb[0].mxu0
    %v388 = vpop.f32.mrb[0].mxu0
    %389 = vdwg.mxu0
    %v390 = vxor.u32 %v384, 2147483648
    %v391 = vxor.u32 %v386, 2147483648
    %v392 = vmul.f32 %v390, 1.442695
    %v393 = vpow.pop %v392
    %v394 = vmul.f32 %v391, 1.442695
    %v395 = vpow.pop %v394
    %v396 = vadd.f32 %v393, 1.0
    %v397 = vadd.f32 %v395, 1.0
    %v398 = vrcp.pop %v396
    %v399 = vmul.f32 1.0, %v398
    %v400 = vrcp.pop %v397
    %v401 = vmul.f32 1.0, %v400
    %v402 = vmul.f32 %v399, %v61
    %v403 = vmul.f32 %v401, %v62
    %404 = vst [vmem:[#allocation8] sm:$0xff] %v402
    %405 = vst [vmem:[#allocation8 + $0x8] sm:$0xff] %v403
    // Predicated region
    $region34: #{tpu_custom_call.1} parent=1 // pred_check
      _
    $region35: #{tpu_custom_call.1} parent=1 // pred_check_branch
      %407 = sbr.rel (0) target = $region37
    $region36: #{tpu_custom_call.1} parent=1 // pred_region
      %s409 = ssub.s32 256, 256
      %410 = vsyncadd [#allocation4], %s409
      %s412 = sshll.u32 [#allocation8], 4
      %s413 = int_to_ptr.vmem [resolvable:$true] %s412
      %415 = dma.vmem_to_hbm [thread:$0]  %s413, 256, %s5, [#allocation4]
    $region37: #{tpu_custom_call.1} parent=1 // pred_fallthru
      _
    // Predicated region
    $region38: #{tpu_custom_call.1} parent=1 // pred_check
      _
    $region39: #{tpu_custom_call.1} parent=1 // pred_check_branch
      %417 = sbr.rel (0) target = $region41
    $region40: #{tpu_custom_call.1} parent=1 // pred_region
      %418 = dma.done [#allocation4], 256
    $region41: #{tpu_custom_call.1} parent=1 // pred_fallthru
      _
    %419 = vsyncpa [#allocation3], 1
    %420 = vsyncpa [#allocation6], 1
    %421 = vsyncpa [#allocation4], 1

</llo_original>
